<compile_context>
chip_gen: v7x
topology: tpu7x:2x2x1
jax: 0.10.0
libtpu: 0.0.40
codegen_flags: <defaults>
</compile_context>

<pallas_src>
import functools
import math

import jax
import jax.numpy as jnp
from jax import lax
from jax.experimental import pallas as pl
from jax.experimental.pallas import tpu as pltpu


_VMEM_LIMIT = 64 * 1024 * 1024


# ----------------------------------------------------------------------------
# Tiling helpers
# ----------------------------------------------------------------------------
def _row_plan(m, target=512):
    """Row tile + (possibly padded) row count for row-tiled kernels."""
    if m <= target:
        return m, m
    for t in range(target, 7, -8):          # multiples of 8, <= target
        if m % t == 0:
            return t, m
    return target, pl.cdiv(m, target) * target   # pad instead of one giant block


def _seq_tile(s, target=512):
    if s <= target:
        return s
    for t in range(target, 7, -8):
        if s % t == 0:
            return t
    return s  # TODO(synk): pad awkward sequence lengths


def _lane_tile(n, target=512):
    """Tile along a lane (last) dimension: must be a multiple of 128 or full."""
    if n <= target:
        return n
    t = (target // 128) * 128
    while t >= 128:
        if n % t == 0:
            return t
        t -= 128
    return n


def _pad_rows(x, padded_m):
    m = x.shape[0]
    if padded_m == m:
        return x
    return jnp.pad(x, ((0, padded_m - m), (0, 0)))


# ----------------------------------------------------------------------------
# Kernels
# ----------------------------------------------------------------------------
def _norm_qkv_rope_kernel(x_ref, nw_ref, w_ref, b_ref, cos_ref, sin_ref,
                          q_ref, k_ref, v_ref, *, d_model, eps):
    """RMSNorm -> widened QKV GEMM (bf16 operands) -> elementwise RoPE.

    The projection weight is [Wq*c | rot(Wq)*c | Wk | rot(Wk) | Wv] so the
    rotate-half permutation never appears in the kernel: q_rot = q*cos + qr*sin.
    """
    x = x_ref[0]                                             # (tm, D) f32
    ms = jnp.mean(x * x, axis=-1, keepdims=True)
    xn = (x * lax.rsqrt(ms + eps) * nw_ref[...]).astype(jnp.bfloat16)
    big = jnp.dot(xn, w_ref[...], preferred_element_type=jnp.float32) + b_ref[...]
    cos = cos_ref[...]                                       # (tm, D) f32
    sin = sin_ref[...]
    D = d_model
    q_ref[0] = (big[:, 0 * D:1 * D] * cos + big[:, 1 * D:2 * D] * sin).astype(jnp.bfloat16)
    k_ref[0] = (big[:, 2 * D:3 * D] * cos + big[:, 3 * D:4 * D] * sin).astype(jnp.bfloat16)
    v_ref[0] = big[:, 4 * D:5 * D].astype(jnp.bfloat16)


def _flash_attn_wo_kernel(q_ref, k_ref, v_ref, mask_ref, res_ref, wo_ref, bo_ref,
                          o_ref, m_sc, l_sc, acc_sc, *, n_heads, head_dim):
    """Online-softmax attention over KV tiles, Wo projection + residual fused.

    Q/K arrive already RoPE'd (and Q pre-scaled by 1/sqrt(head_dim)).
    mask is an O(S) key-padding mask (1 = masked key position).
    """
    kv = pl.program_id(1)

    @pl.when(kv == 0)
    def _():
        m_sc[...] = jnp.full(m_sc.shape, -jnp.inf, jnp.float32)
        l_sc[...] = jnp.zeros(l_sc.shape, jnp.float32)
        acc_sc[...] = jnp.zeros(acc_sc.shape, jnp.float32)

    q = q_ref[0]                                             # (S,  D) bf16
    k = k_ref[0]                                             # (tkv, D) bf16
    v = v_ref[0]                                             # (tkv, D) bf16
    mrow = mask_ref[0]                                       # (1, tkv) int32

    for h in range(n_heads):                                 # static unroll
        lo = h * head_dim
        hi = lo + head_dim
        qh = q[:, lo:hi]
        kh = k[:, lo:hi]
        vh = v[:, lo:hi]
        # Contract last dims directly (no explicit K transpose).
        s = lax.dot_general(qh, kh, (((1,), (1,)), ((), ())),
                            preferred_element_type=jnp.float32)      # (S, tkv)
        s = jnp.where(mrow != 0, -1e10, s)                   # masked_fill semantics
        m_prev = m_sc[h]
        m_new = jnp.maximum(m_prev, jnp.max(s, axis=-1, keepdims=True))
        alpha = jnp.exp(m_prev - m_new)
        p = jnp.exp(s - m_new)
        l_sc[h] = alpha * l_sc[h] + jnp.sum(p, axis=-1, keepdims=True)
        acc_sc[h] = alpha * acc_sc[h] + jnp.dot(
            p.astype(jnp.bfloat16), vh, preferred_element_type=jnp.float32)
        m_sc[h] = m_new

    @pl.when(kv == pl.num_programs(1) - 1)
    def _():
        out = res_ref[0] + bo_ref[...]                       # residual + bo
        for h in range(n_heads):
            lo = h * head_dim
            hi = lo + head_dim
            oh = acc_sc[h] * pl.reciprocal(l_sc[h], approx=True)     # (S, hd)
            out = out + jnp.dot(oh.astype(jnp.bfloat16), wo_ref[lo:hi, :],
                                preferred_element_type=jnp.float32)
        o_ref[0] = out


def _norm_ffn_residual_kernel(x_ref, nw_ref, w1_ref, b1_ref, w2_ref, b2_ref,
                              o_ref, xn_sc, *, eps):
    """x + FFN(RMSNorm(x)) with d_ff as a reduction grid axis.

    The output block is resident across the f axis and used as the accumulator.
    """
    f = pl.program_id(1)

    @pl.when(f == 0)
    def _():
        x = x_ref[...]
        ms = jnp.mean(x * x, axis=-1, keepdims=True)
        xn_sc[...] = (x * lax.rsqrt(ms + eps) * nw_ref[...]).astype(jnp.bfloat16)
        o_ref[...] = x + b2_ref[...]                         # residual + final bias

    h = jnp.dot(xn_sc[...], w1_ref[...], preferred_element_type=jnp.float32) + b1_ref[...]
    h = jnp.maximum(h, 0.0).astype(jnp.bfloat16)             # ReLU (f32 math)
    o_ref[...] += jnp.dot(h, w2_ref[...], preferred_element_type=jnp.float32)


def _rmsnorm_kernel(x_ref, w_ref, o_ref, *, eps):
    x = x_ref[...]
    ms = jnp.mean(x * x, axis=-1, keepdims=True)
    o_ref[...] = x * lax.rsqrt(ms + eps) * w_ref[...]


# ----------------------------------------------------------------------------
# Pallas wrappers
# ----------------------------------------------------------------------------
def norm_qkv_rope(x, nw, w5, b5, cos_t, sin_t, eps=1e-6):
    B, S, D = x.shape
    N = w5.shape[1]                                          # 5*D
    ts = _seq_tile(S)
    grid = (B, S // ts)
    out_shapes = tuple(jax.ShapeDtypeStruct((B, S, D), jnp.bfloat16) for _ in range(3))
    out_specs = tuple(pl.BlockSpec((1, ts, D), lambda b, s: (b, s, 0)) for _ in range(3))
    return pl.pallas_call(
        functools.partial(_norm_qkv_rope_kernel, d_model=D, eps=eps),
        grid=grid,
        in_specs=[
            pl.BlockSpec((1, ts, D), lambda b, s: (b, s, 0)),
            pl.BlockSpec((1, D), lambda b, s: (0, 0)),
            pl.BlockSpec((D, N), lambda b, s: (0, 0)),
            pl.BlockSpec((1, N), lambda b, s: (0, 0)),
            pl.BlockSpec((ts, D), lambda b, s: (s, 0)),
            pl.BlockSpec((ts, D), lambda b, s: (s, 0)),
        ],
        out_specs=out_specs,
        out_shape=out_shapes,
        compiler_params=pltpu.CompilerParams(
            dimension_semantics=("parallel", "parallel"),
            vmem_limit_bytes=_VMEM_LIMIT),
    )(x, nw.reshape(1, D), w5, b5.reshape(1, N), cos_t, sin_t)


def flash_attention_wo(q, k, v, pad_mask3, res, wo, bo, n_heads, head_dim):
    B, S, D = q.shape
    tkv = _lane_tile(S)
    grid = (B, S // tkv)
    return pl.pallas_call(
        functools.partial(_flash_attn_wo_kernel, n_heads=n_heads, head_dim=head_dim),
        grid=grid,
        in_specs=[
            pl.BlockSpec((1, S, D), lambda b, kv: (b, 0, 0)),
            pl.BlockSpec((1, tkv, D), lambda b, kv: (b, kv, 0)),
            pl.BlockSpec((1, tkv, D), lambda b, kv: (b, kv, 0)),
            pl.BlockSpec((1, 1, tkv), lambda b, kv: (b, 0, kv)),
            pl.BlockSpec((1, S, D), lambda b, kv: (b, 0, 0)),
            pl.BlockSpec((D, D), lambda b, kv: (0, 0)),
            pl.BlockSpec((1, D), lambda b, kv: (0, 0)),
        ],
        out_specs=pl.BlockSpec((1, S, D), lambda b, kv: (b, 0, 0)),
        out_shape=jax.ShapeDtypeStruct((B, S, D), jnp.float32),
        scratch_shapes=[
            pltpu.VMEM((n_heads, S, 1), jnp.float32),        # running max
            pltpu.VMEM((n_heads, S, 1), jnp.float32),        # running denom
            pltpu.VMEM((n_heads, S, head_dim), jnp.float32),  # running PV accum
        ],
        compiler_params=pltpu.CompilerParams(
            dimension_semantics=("parallel", "arbitrary"),
            vmem_limit_bytes=_VMEM_LIMIT),
    )(q, k, v, pad_mask3, res, wo, bo.reshape(1, D))


def norm_ffn_residual(x2d, nw, w1, b1, w2, b2, eps=1e-6):
    m, d = x2d.shape
    fdim = w1.shape[1]
    tm, mp = _row_plan(m)
    tf = _lane_tile(fdim)
    xin = _pad_rows(x2d, mp)
    out = pl.pallas_call(
        functools.partial(_norm_ffn_residual_kernel, eps=eps),
        grid=(mp // tm, fdim // tf),
        in_specs=[
            pl.BlockSpec((tm, d), lambda i, f: (i, 0)),
            pl.BlockSpec((1, d), lambda i, f: (0, 0)),
            pl.BlockSpec((d, tf), lambda i, f: (0, f)),
            pl.BlockSpec((1, tf), lambda i, f: (0, f)),
            pl.BlockSpec((tf, d), lambda i, f: (f, 0)),
            pl.BlockSpec((1, d), lambda i, f: (0, 0)),
        ],
        out_specs=pl.BlockSpec((tm, d), lambda i, f: (i, 0)),
        out_shape=jax.ShapeDtypeStruct((mp, d), jnp.float32),
        scratch_shapes=[pltpu.VMEM((tm, d), jnp.bfloat16)],
        compiler_params=pltpu.CompilerParams(
            dimension_semantics=("parallel", "arbitrary"),
            vmem_limit_bytes=_VMEM_LIMIT),
    )(xin, nw.reshape(1, d), w1, b1.reshape(1, fdim), w2, b2.reshape(1, d))
    return out if mp == m else out[:m]


def rmsnorm(x2d, w, eps=1e-6):
    m, d = x2d.shape
    tm, mp = _row_plan(m)
    xin = _pad_rows(x2d, mp)
    out = pl.pallas_call(
        functools.partial(_rmsnorm_kernel, eps=eps),
        grid=(mp // tm,),
        in_specs=[
            pl.BlockSpec((tm, d), lambda i: (i, 0)),
            pl.BlockSpec((1, d), lambda i: (0, 0)),
        ],
        out_specs=pl.BlockSpec((tm, d), lambda i: (i, 0)),
        out_shape=jax.ShapeDtypeStruct((mp, d), jnp.float32),
        compiler_params=pltpu.CompilerParams(
            dimension_semantics=("parallel",),
            vmem_limit_bytes=_VMEM_LIMIT),
    )(xin, w.reshape(1, d))
    return out if mp == m else out[:m]


# ----------------------------------------------------------------------------
# Parameter setup (host-side weight folding) + orchestration
# ----------------------------------------------------------------------------
def get_rotary_tables(seq_len, head_dim, n_heads):
    """Full-width cos/sin tables tiled across heads: (S, n_heads*head_dim)."""
    hd2 = head_dim // 2
    inv_freq = 1.0 / (10000.0 ** (jnp.arange(hd2, dtype=jnp.float32) / hd2))
    t = jnp.arange(seq_len, dtype=jnp.float32)
    freqs = jnp.outer(t, inv_freq)                           # (S, hd/2)
    cos = jnp.cos(freqs)
    sin = jnp.sin(freqs)
    cos_full = jnp.concatenate([cos, cos], axis=-1)          # (S, hd)
    sin_full = jnp.concatenate([sin, sin], axis=-1)
    return jnp.tile(cos_full, (1, n_heads)), jnp.tile(sin_full, (1, n_heads))


def _rotate_half_cols(w, n_heads, head_dim):
    """Per-head [-x2, x1] column permutation folded into projection weights."""
    hd2 = head_dim // 2
    wr = w.reshape(w.shape[:-1] + (n_heads, head_dim))
    out = jnp.concatenate([-wr[..., hd2:], wr[..., :hd2]], axis=-1)
    return out.reshape(w.shape)


def init_params(key, vocab, d_model, n_heads, n_layers, d_ff):
    head_dim = d_model // n_heads
    inv_scale = 1.0 / math.sqrt(head_dim)

    def dense(k, fan_in, fan_out):
        kw, _ = jax.random.split(k)
        w = jax.random.normal(kw, (fan_in, fan_out), jnp.float32) * 0.02
        b = jnp.zeros((fan_out,), jnp.float32)
        return w, b

    keys = jax.random.split(key, 1 + n_layers)
    params = {
        "emb": jax.random.normal(keys[0], (vocab, d_model), jnp.float32) * 0.02,
        "final_norm": jnp.ones((d_model,), jnp.float32),
        "layers": [],
    }
    for li in range(n_layers):
        lk = jax.random.split(keys[1 + li], 6)
        wq, bq = dense(lk[0], d_model, d_model)
        wk, bk = dense(lk[1], d_model, d_model)
        wv, bv = dense(lk[2], d_model, d_model)
        wo, bo = dense(lk[3], d_model, d_model)
        w1, b1 = dense(lk[4], d_model, d_ff)
        w2, b2 = dense(lk[5], d_ff, d_model)

        # Fold 1/sqrt(head_dim) into Q and the rotate-half permutation into the
        # widened projection: [Wq*c | rot(Wq)*c | Wk | rot(Wk) | Wv].
        wq_s, bq_s = wq * inv_scale, bq * inv_scale
        w5 = jnp.concatenate(
            [wq_s, _rotate_half_cols(wq_s, n_heads, head_dim),
             wk, _rotate_half_cols(wk, n_heads, head_dim), wv], axis=1)
        b5 = jnp.concatenate(
            [bq_s, _rotate_half_cols(bq_s, n_heads, head_dim),
             bk, _rotate_half_cols(bk, n_heads, head_dim), bv], axis=0)

        layer = {
            # The PyTorch EncoderLayer reuses ONE RMSNorm weight for both norms.
            "norm": jnp.ones((d_model,), jnp.float32),
            "wqkv5": w5.astype(jnp.bfloat16),                # bf16 MXU operands
            "bqkv5": b5,                                     # f32 bias
            "wo": wo.astype(jnp.bfloat16),
            "bo": bo,
            "w1": w1.astype(jnp.bfloat16),
            "b1": b1,
            "w2": w2.astype(jnp.bfloat16),
            "b2": b2,
        }
        params["layers"].append(layer)
    return params


def encoder_forward(params, src, key_pad_mask, d_model, n_heads):
    """src: (B, S) int32 token ids; key_pad_mask: (B, S) bool, True = masked key.

    TODO(synk): arbitrary (B, S, S) attention masks would need the full-mask
    BlockSpec path; the reference test uses a key-padding mask, handled O(S).
    """
    B, S = src.shape
    head_dim = d_model // n_heads

    # TODO(synk): embedding gather (data-dependent lookup) kept in plain JAX.
    x = math.sqrt(d_model) * jnp.take(params["emb"], src, axis=0)    # (B, S, D) f32
    # dropout: identity (inference)

    cos_t, sin_t = get_rotary_tables(S, head_dim, n_heads)           # (S, D) each
    mask3 = key_pad_mask.astype(jnp.int32).reshape(B, 1, S)          # O(S) mask

    for layer in params["layers"]:
        # ---- self-attention block: norm+QKV+RoPE, then flash attn + Wo + res --
        q, k, v = norm_qkv_rope(x, layer["norm"], layer["wqkv5"], layer["bqkv5"],
                                cos_t, sin_t)
        x = flash_attention_wo(q, k, v, mask3, x, layer["wo"], layer["bo"],
                               n_heads, head_dim)

        # ---- feed-forward block: norm + FFN (d_ff-tiled reduction) + residual --
        x2d = norm_ffn_residual(x.reshape(B * S, d_model), layer["norm"],
                                layer["w1"], layer["b1"], layer["w2"], layer["b2"])
        x = x2d.reshape(B, S, d_model)

    x2d = rmsnorm(x.reshape(B * S, d_model), params["final_norm"])
    return x2d.reshape(B, S, d_model)


# ----------------------------------------------------------------------------
if __name__ == "__main__":
    B, S = 2, 8
    VOCAB = 50
    D_MODEL, N_HEADS, N_LAYERS, D_FF = 32, 4, 2, 64

    key = jax.random.PRNGKey(0)
    k_par, k_src = jax.random.split(key)

    params = init_params(k_par, VOCAB, D_MODEL, N_HEADS, N_LAYERS, D_FF)
    src = jax.random.randint(k_src, (B, S), 0, VOCAB, dtype=jnp.int32)

    # Key-padding mask: True where the key position is padded (masked out).
    lengths = jnp.array([S, S - 2], dtype=jnp.int32)
    key_pad = jnp.arange(S)[None, :] >= lengths[:, None]              # (B, S) bool

    out = encoder_forward(params, src, key_pad, D_MODEL, N_HEADS)
    out = jax.block_until_ready(out)
    assert out.shape == (B, S, D_MODEL)
    print("KERNEL_OK")
</pallas_src>

<mosaic_0001>
module attributes {stable_mosaic.version = 11 : i64} {
  func.func @_norm_qkv_rope_kernel(%arg0: i32, %arg1: i32, %arg2: memref<1x8x32xf32, #tpu.memory_space<vmem>>, %arg3: memref<1x32xf32, #tpu.memory_space<vmem>>, %arg4: memref<32x160xbf16, #tpu.memory_space<vmem>>, %arg5: memref<1x160xf32, #tpu.memory_space<vmem>>, %arg6: memref<8x32xf32, #tpu.memory_space<vmem>>, %arg7: memref<8x32xf32, #tpu.memory_space<vmem>>, %arg8: memref<1x8x32xbf16, #tpu.memory_space<vmem>>, %arg9: memref<1x8x32xbf16, #tpu.memory_space<vmem>>, %arg10: memref<1x8x32xbf16, #tpu.memory_space<vmem>>) attributes {dimension_semantics = [#tpu.dimension_semantics<parallel>, #tpu.dimension_semantics<parallel>], iteration_bounds = array<i64: 2, 1>, scalar_prefetch = 0 : i64, scratch_operands = 0 : i64, tpu.core_type = #tpu.core_type<tc>, window_params = [{transform_indices = @transform_0, window_bounds = array<i64: 1, 8, 32>}, {pipeline_mode = #tpu.pipeline_mode<synchronous>, transform_indices = @transform_1, window_bounds = array<i64: 1, 32>}, {pipeline_mode = #tpu.pipeline_mode<synchronous>, transform_indices = @transform_2, window_bounds = array<i64: 32, 160>}, {pipeline_mode = #tpu.pipeline_mode<synchronous>, transform_indices = @transform_3, window_bounds = array<i64: 1, 160>}, {transform_indices = @transform_4, window_bounds = array<i64: 8, 32>}, {transform_indices = @transform_5, window_bounds = array<i64: 8, 32>}, {transform_indices = @transform_6, window_bounds = array<i64: 1, 8, 32>}, {transform_indices = @transform_7, window_bounds = array<i64: 1, 8, 32>}, {transform_indices = @transform_8, window_bounds = array<i64: 1, 8, 32>}]} {
    %c0 = arith.constant 0 : index
    %c0_0 = arith.constant 0 : index
    %c0_1 = arith.constant 0 : index
    %0 = vector.load %arg2[%c0, %c0_0, %c0_1] : memref<1x8x32xf32, #tpu.memory_space<vmem>>, vector<1x8x32xf32>
    %1 = vector.shape_cast %0 : vector<1x8x32xf32> to vector<8x32xf32>
    %2 = arith.mulf %1, %1 : vector<8x32xf32>
    %cst = arith.constant dense<0.000000e+00> : vector<8xf32>
    %3 = vector.multi_reduction <add>, %2, %cst [1] : vector<8x32xf32> to vector<8xf32>
    %4 = vector.shape_cast %3 : vector<8xf32> to vector<8x1xf32>
    %cst_2 = arith.constant 3.200000e+01 : f32
    %5 = vector.broadcast %cst_2 : f32 to vector<8x1xf32>
    %6 = arith.divf %4, %5 : vector<8x1xf32>
    %cst_3 = arith.constant 9.99999997E-7 : f32
    %7 = vector.broadcast %cst_3 : f32 to vector<8x1xf32>
    %8 = arith.addf %6, %7 : vector<8x1xf32>
    %9 = math.rsqrt %8 : vector<8x1xf32>
    %10 = vector.broadcast %9 : vector<8x1xf32> to vector<8x32xf32>
    %11 = arith.mulf %1, %10 : vector<8x32xf32>
    %c0_4 = arith.constant 0 : index
    %c0_5 = arith.constant 0 : index
    %12 = vector.load %arg3[%c0_4, %c0_5] : memref<1x32xf32, #tpu.memory_space<vmem>>, vector<1x32xf32>
    %13 = vector.broadcast %12 : vector<1x32xf32> to vector<8x32xf32>
    %14 = arith.mulf %11, %13 : vector<8x32xf32>
    %15 = arith.truncf %14 : vector<8x32xf32> to vector<8x32xbf16>
    %c0_6 = arith.constant 0 : index
    %c0_7 = arith.constant 0 : index
    %16 = vector.load %arg4[%c0_6, %c0_7] : memref<32x160xbf16, #tpu.memory_space<vmem>>, vector<32x160xbf16>
    %cst_8 = arith.constant dense<0.000000e+00> : vector<8x160xf32>
    %17 = tpu.matmul %15, %16, %cst_8 {dimension_numbers = #tpu.dot_dimension_numbers<[1], [0], [0], [1], [0, 0, 1, 1], [], []>} : vector<8x32xbf16>, vector<32x160xbf16>, vector<8x160xf32> -> vector<8x160xf32>
    %c0_9 = arith.constant 0 : index
    %c0_10 = arith.constant 0 : index
    %18 = vector.load %arg5[%c0_9, %c0_10] : memref<1x160xf32, #tpu.memory_space<vmem>>, vector<1x160xf32>
    %19 = vector.broadcast %18 : vector<1x160xf32> to vector<8x160xf32>
    %20 = arith.addf %17, %19 : vector<8x160xf32>
    %c0_11 = arith.constant 0 : index
    %c0_12 = arith.constant 0 : index
    %21 = vector.load %arg6[%c0_11, %c0_12] : memref<8x32xf32, #tpu.memory_space<vmem>>, vector<8x32xf32>
    %c0_13 = arith.constant 0 : index
    %c0_14 = arith.constant 0 : index
    %22 = vector.load %arg7[%c0_13, %c0_14] : memref<8x32xf32, #tpu.memory_space<vmem>>, vector<8x32xf32>
    %23 = vector.extract_strided_slice %20 {offsets = [0, 0], sizes = [8, 32], strides = [1, 1]} : vector<8x160xf32> to vector<8x32xf32>
    %24 = arith.mulf %23, %21 : vector<8x32xf32>
    %25 = vector.extract_strided_slice %20 {offsets = [0, 32], sizes = [8, 32], strides = [1, 1]} : vector<8x160xf32> to vector<8x32xf32>
    %26 = arith.mulf %25, %22 : vector<8x32xf32>
    %27 = arith.addf %24, %26 : vector<8x32xf32>
    %28 = arith.truncf %27 : vector<8x32xf32> to vector<8x32xbf16>
    %c0_15 = arith.constant 0 : index
    %c0_16 = arith.constant 0 : index
    %c0_17 = arith.constant 0 : index
    %29 = vector.load %arg8[%c0_15, %c0_16, %c0_17] : memref<1x8x32xbf16, #tpu.memory_space<vmem>>, vector<1x8x32xbf16>
    %30 = vector.shape_cast %29 : vector<1x8x32xbf16> to vector<8x32xbf16>
    %31 = vector.shape_cast %28 : vector<8x32xbf16> to vector<1x8x32xbf16>
    tpu.vector_store %arg8[%c0_15, %c0_16, %c0_17], %31 {strides = array<i32>} : memref<1x8x32xbf16, #tpu.memory_space<vmem>>, vector<1x8x32xbf16>,
    %32 = vector.extract_strided_slice %20 {offsets = [0, 64], sizes = [8, 32], strides = [1, 1]} : vector<8x160xf32> to vector<8x32xf32>
    %33 = arith.mulf %32, %21 : vector<8x32xf32>
    %34 = vector.extract_strided_slice %20 {offsets = [0, 96], sizes = [8, 32], strides = [1, 1]} : vector<8x160xf32> to vector<8x32xf32>
    %35 = arith.mulf %34, %22 : vector<8x32xf32>
    %36 = arith.addf %33, %35 : vector<8x32xf32>
    %37 = arith.truncf %36 : vector<8x32xf32> to vector<8x32xbf16>
    %c0_18 = arith.constant 0 : index
    %c0_19 = arith.constant 0 : index
    %c0_20 = arith.constant 0 : index
    %38 = vector.load %arg9[%c0_18, %c0_19, %c0_20] : memref<1x8x32xbf16, #tpu.memory_space<vmem>>, vector<1x8x32xbf16>
    %39 = vector.shape_cast %38 : vector<1x8x32xbf16> to vector<8x32xbf16>
    %40 = vector.shape_cast %37 : vector<8x32xbf16> to vector<1x8x32xbf16>
    tpu.vector_store %arg9[%c0_18, %c0_19, %c0_20], %40 {strides = array<i32>} : memref<1x8x32xbf16, #tpu.memory_space<vmem>>, vector<1x8x32xbf16>,
    %41 = vector.extract_strided_slice %20 {offsets = [0, 128], sizes = [8, 32], strides = [1, 1]} : vector<8x160xf32> to vector<8x32xf32>
    %42 = arith.truncf %41 : vector<8x32xf32> to vector<8x32xbf16>
    %c0_21 = arith.constant 0 : index
    %c0_22 = arith.constant 0 : index
    %c0_23 = arith.constant 0 : index
    %43 = vector.load %arg10[%c0_21, %c0_22, %c0_23] : memref<1x8x32xbf16, #tpu.memory_space<vmem>>, vector<1x8x32xbf16>
    %44 = vector.shape_cast %43 : vector<1x8x32xbf16> to vector<8x32xbf16>
    %45 = vector.shape_cast %42 : vector<8x32xbf16> to vector<1x8x32xbf16>
    tpu.vector_store %arg10[%c0_21, %c0_22, %c0_23], %45 {strides = array<i32>} : memref<1x8x32xbf16, #tpu.memory_space<vmem>>, vector<1x8x32xbf16>,
    return
  }
  func.func @transform_0(%arg0: i32, %arg1: i32) -> (i32, i32, i32) {
    %c0_i32 = arith.constant 0 : i32
    %c0_i32_0 = arith.constant 0 : i32
    return %arg0, %arg1, %c0_i32 : i32, i32, i32
  }
  func.func @transform_1(%arg0: i32, %arg1: i32) -> (i32, i32) {
    %c0_i32 = arith.constant 0 : i32
    %c0_i32_0 = arith.constant 0 : i32
    %c0_i32_1 = arith.constant 0 : i32
    return %c0_i32, %c0_i32_0 : i32, i32
  }
  func.func @transform_2(%arg0: i32, %arg1: i32) -> (i32, i32) {
    %c0_i32 = arith.constant 0 : i32
    %c0_i32_0 = arith.constant 0 : i32
    %c0_i32_1 = arith.constant 0 : i32
    return %c0_i32, %c0_i32_0 : i32, i32
  }
  func.func @transform_3(%arg0: i32, %arg1: i32) -> (i32, i32) {
    %c0_i32 = arith.constant 0 : i32
    %c0_i32_0 = arith.constant 0 : i32
    %c0_i32_1 = arith.constant 0 : i32
    return %c0_i32, %c0_i32_0 : i32, i32
  }
  func.func @transform_4(%arg0: i32, %arg1: i32) -> (i32, i32) {
    %c0_i32 = arith.constant 0 : i32
    %c0_i32_0 = arith.constant 0 : i32
    return %arg1, %c0_i32 : i32, i32
  }
  func.func @transform_5(%arg0: i32, %arg1: i32) -> (i32, i32) {
    %c0_i32 = arith.constant 0 : i32
    %c0_i32_0 = arith.constant 0 : i32
    return %arg1, %c0_i32 : i32, i32
  }
  func.func @transform_6(%arg0: i32, %arg1: i32) -> (i32, i32, i32) {
    %c0_i32 = arith.constant 0 : i32
    %c0_i32_0 = arith.constant 0 : i32
    return %arg0, %arg1, %c0_i32 : i32, i32, i32
  }
  func.func @transform_7(%arg0: i32, %arg1: i32) -> (i32, i32, i32) {
    %c0_i32 = arith.constant 0 : i32
    %c0_i32_0 = arith.constant 0 : i32
    return %arg0, %arg1, %c0_i32 : i32, i32, i32
  }
  func.func @transform_8(%arg0: i32, %arg1: i32) -> (i32, i32, i32) {
    %c0_i32 = arith.constant 0 : i32
    %c0_i32_0 = arith.constant 0 : i32
    return %arg0, %arg1, %c0_i32 : i32, i32, i32
  }
}

</mosaic_0001>

<llo_original>
// kernel: tpu_custom_call.1
$region0: #{tpu_custom_call.1}
  #allocation0 [shape = 'u32[]', space=smem, size = 0x4, offset = 0x4, fixed_abs, tag = 'smem constant byte address 0x4 - core index']
  #allocation1 [shape = 'u32[144,128]{1,0:T(1,128)}', space=vmem, size = 0x12000, scoped, tag = 'internal scratch']
  %s0 = inlined_call_operand.hbm [shape: f32[2,8,32], index: 0, kind: input, shape index: {}]
  %s1 = inlined_call_operand.hbm [shape: f32[1,32], index: 1, kind: input, shape index: {}]
  %s2 = inlined_call_operand.hbm [shape: bf16[32,160], index: 2, kind: input, shape index: {}]
  %s3 = inlined_call_operand.hbm [shape: f32[1,160], index: 3, kind: input, shape index: {}]
  %s4 = inlined_call_operand.hbm [shape: f32[8,32], index: 4, kind: input, shape index: {}]
  %s5 = inlined_call_operand.hbm [shape: f32[8,32], index: 5, kind: input, shape index: {}]
  %s6 = inlined_call_operand.hbm [shape: bf16[2,8,32], index: 6, kind: output, shape index: {0}]
  %s7 = inlined_call_operand.hbm [shape: bf16[2,8,32], index: 7, kind: output, shape index: {1}]
  %s8 = inlined_call_operand.hbm [shape: bf16[2,8,32], index: 8, kind: output, shape index: {2}]
  %9 = xla_tuple %s6, %s7, %s8
  %s10 = sld [smem:[#allocation0]]
  $region97: #{tpu_custom_call.1} parent=0
    _
  %s12 = ssub.s32 1, %s10
  %s13 = scalar_select 0, %s12, %s10
  $region1: #{tpu_custom_call.1} parent=0
    #allocation2 [shape = 'u8[8192]{0}', space=vmem, size = 0x2000, scoped, tag = 'input window, operand 0']
    #allocation3 [shape = 's32[2]{0}', space=sflag, size = 0x8, scoped, tag = 'scoped memory for tpu_custom_call.1']
    #allocation4 [shape = 's32[2]{0}', space=sflag, size = 0x8, scoped, tag = 'scoped memory for tpu_custom_call.1']
    #allocation5 [shape = 'u8[512]{0}', space=vmem, size = 0x400, scoped, tag = 'input window, operand 1, single buffered']
    #allocation6 [shape = 's32[1]{0}', space=sflag, size = 0x4, scoped, tag = 'scoped memory for tpu_custom_call.1']
    #allocation7 [shape = 'u8[16384]{0}', space=vmem, size = 0x4000, scoped, tag = 'input window, operand 2, single buffered']
    #allocation8 [shape = 'u8[1024]{0}', space=vmem, size = 0x400, scoped, tag = 'input window, operand 3, single buffered']
    #allocation9 [shape = 's32[1]{0}', space=sflag, size = 0x4, scoped, tag = 'scoped memory for tpu_custom_call.1']
    #allocation10 [shape = 'u8[4096]{0}', space=vmem, size = 0x1000, scoped, tag = 'input window, operand 4, single buffered']
    #allocation11 [shape = 'u8[4096]{0}', space=vmem, size = 0x1000, scoped, tag = 'input window, operand 5, single buffered']
    #allocation12 [shape = 's32[1]{0}', space=sflag, size = 0x4, scoped, tag = 'scoped memory for tpu_custom_call.1']
    #allocation13 [shape = 'u8[4096]{0}', space=vmem, size = 0x1000, scoped, tag = 'output window, operand 0']
    #allocation14 [shape = 'u8[4096]{0}', space=vmem, size = 0x1000, scoped, tag = 'output window, operand 1']
    #allocation15 [shape = 's32[2]{0}', space=sflag, size = 0x8, scoped, tag = 'scoped memory for tpu_custom_call.1']
    #allocation16 [shape = 'u8[4096]{0}', space=vmem, size = 0x1000, scoped, tag = 'output window, operand 2']
    %14 = vsyncpa [#allocation3], 0
    %s15 = scalar_lea.sflag [#allocation3], 1
    %16 = vsyncpa %s15, 0
    %17 = vsyncpa [#allocation6], 0
    %18 = vsyncpa [#allocation9], 0
    %19 = vsyncpa [#allocation12], 0
    %20 = vsyncpa [#allocation4], 0
    %s21 = scalar_lea.sflag [#allocation4], 1
    %22 = vsyncpa %s21, 0
    %23 = vsyncpa [#allocation15], 0
    %s24 = scalar_lea.sflag [#allocation15], 1
    %25 = vsyncpa %s24, 0
    loop: start=0, step=1, limit=4
    $region2: #{tpu_custom_call.1} parent=1 // loop_pre_header
      _
    $region3: #{tpu_custom_call.1} parent=1 // loop_header
      %s27 = sphi 0, %s31
      %p28 = scmp.ge.s32.totalorder %s27, 4
      %s34 = sphi 0, %s46
      %s35 = sphi 0, %s42
      %s36 = sphi 0, %s34
      %s37 = sphi 0, %s35
      %s38 = sphi 0, %s36
      %s39 = sphi 0, %s37
      %s51 = sphi 0, %s53
      %s54 = sphi 0, %s51
      %s55 = sphi 0, %s54
      %s71 = sphi 0, %s55
      %s75 = sphi 0, %s75
      %s77 = sphi 0, %s75
      %s78 = sphi 0, %s77
      %s92 = sphi 0, %s78
      %s96 = sphi 0, %s96
      %s98 = sphi 0, %s96
      %s99 = sphi 0, %s98
      %s113 = sphi 0, %s99
      %s117 = sphi 0, %s117
      %s119 = sphi 0, %s117
      %s120 = sphi 0, %s119
      %s134 = sphi 0, %s120
      %s140 = sphi 0, %s142
      %s143 = sphi 0, %s140
      %s144 = sphi 0, %s143
      %s160 = sphi 0, %s144
      %s166 = sphi 0, %s168
      %s169 = sphi 0, %s166
      %s170 = sphi 0, %s169
      %s186 = sphi 0, %s170
      %s194 = sphi 0, %s196
      %s197 = sphi 0, %s194
      %s198 = sphi 0, %s197
      %s214 = sphi 0, %s198
      %s222 = sphi 0, %s224
      %s225 = sphi 0, %s222
      %s226 = sphi 0, %s225
      %s242 = sphi 0, %s226
      %s250 = sphi 0, %s252
      %s253 = sphi 0, %s250
      %s254 = sphi 0, %s253
      %s270 = sphi 0, %s254
    $region4: #{tpu_custom_call.1} parent=1 // loop_header_branch
      %30 = sbr.rel (%p28) target = $region8
    $region5: #{tpu_custom_call.1} parent=1 // loop_body
      %s32 = ssub.s32 %s27, 1
      %s33 = ssub.s32 %s27, 2
      %s40 = sadd.s32 1, %s35
      %p41 = scmp.ge.s32.totalorder %s40, 1
      %s42 = scalar_select %p41, 0, %s40
      %s43 = sadd.s32 1, %s34
      %s44 = scalar_select %p41, %s43, %s34
      %p45 = scmp.ge.s32.totalorder %s44, 2
      %s46 = scalar_select %p45, 0, %s44
      %s47 = ssub.s32 %s34, %s46
      %s48 = ssub.s32 %s35, %s42
      %s49 = sor.u32 %s47, %s48
      %p50 = scmp.eq.s32.totalorder %s49, 0
      %s52 = sadd.s32 %s51, 1
      %s53 = scalar_select %p50, %s51, %s52
      %p56 = pneg %p50
      %p57 = scmp.eq.s32.totalorder %s27, 1
      %p58 = por %p56, %p57
      %p59 = scmp.ne.s32.totalorder %s51, %s54
      %p60 = scmp.eq.s32.totalorder %s27, 0
      %p61 = por %p59, %p60
      %p62 = scmp.ne.s32.totalorder %s51, %s54
      %p63 = scmp.eq.s32.totalorder %s32, 1
      %p64 = por %p62, %p63
      %p65 = scmp.ne.s32.totalorder %s54, %s55
      %p66 = scmp.eq.s32.totalorder %s32, 0
      %p67 = por %p65, %p66
      %p68 = scmp.ne.s32.totalorder %s54, %s55
      %p69 = scmp.eq.s32.totalorder %s33, 1
      %p70 = por %p68, %p69
      %p72 = scmp.ne.s32.totalorder %s55, %s71
      %p73 = scmp.eq.s32.totalorder %s33, 0
      %p74 = por %p72, %p73
      %s76 = sadd.s32 %s75, 1
      %p79 = scmp.eq.s32.totalorder %s27, 1
      %p80 = scmp.ne.s32.totalorder %s75, %s77
      %p81 = scmp.eq.s32.totalorder %s27, 0
      %p82 = por %p80, %p81
      %p83 = scmp.ne.s32.totalorder %s75, %s77
      %p84 = scmp.eq.s32.totalorder %s32, 1
      %p85 = por %p83, %p84
      %p86 = scmp.ne.s32.totalorder %s77, %s78
      %p87 = scmp.eq.s32.totalorder %s32, 0
      %p88 = por %p86, %p87
      %p89 = scmp.ne.s32.totalorder %s77, %s78
      %p90 = scmp.eq.s32.totalorder %s33, 1
      %p91 = por %p89, %p90
      %p93 = scmp.ne.s32.totalorder %s78, %s92
      %p94 = scmp.eq.s32.totalorder %s33, 0
      %p95 = por %p93, %p94
      %s97 = sadd.s32 %s96, 1
      %p100 = scmp.eq.s32.totalorder %s27, 1
      %p101 = scmp.ne.s32.totalorder %s96, %s98
      %p102 = scmp.eq.s32.totalorder %s27, 0
      %p103 = por %p101, %p102
      %p104 = scmp.ne.s32.totalorder %s96, %s98
      %p105 = scmp.eq.s32.totalorder %s32, 1
      %p106 = por %p104, %p105
      %p107 = scmp.ne.s32.totalorder %s98, %s99
      %p108 = scmp.eq.s32.totalorder %s32, 0
      %p109 = por %p107, %p108
      %p110 = scmp.ne.s32.totalorder %s98, %s99
      %p111 = scmp.eq.s32.totalorder %s33, 1
      %p112 = por %p110, %p111
      %p114 = scmp.ne.s32.totalorder %s99, %s113
      %p115 = scmp.eq.s32.totalorder %s33, 0
      %p116 = por %p114, %p115
      %s118 = sadd.s32 %s117, 1
      %p121 = scmp.eq.s32.totalorder %s27, 1
      %p122 = scmp.ne.s32.totalorder %s117, %s119
      %p123 = scmp.eq.s32.totalorder %s27, 0
      %p124 = por %p122, %p123
      %p125 = scmp.ne.s32.totalorder %s117, %s119
      %p126 = scmp.eq.s32.totalorder %s32, 1
      %p127 = por %p125, %p126
      %p128 = scmp.ne.s32.totalorder %s119, %s120
      %p129 = scmp.eq.s32.totalorder %s32, 0
      %p130 = por %p128, %p129
      %p131 = scmp.ne.s32.totalorder %s119, %s120
      %p132 = scmp.eq.s32.totalorder %s33, 1
      %p133 = por %p131, %p132
      %p135 = scmp.ne.s32.totalorder %s120, %s134
      %p136 = scmp.eq.s32.totalorder %s33, 0
      %p137 = por %p135, %p136
      %s138 = ssub.s32 %s35, %s42
      %p139 = scmp.eq.s32.totalorder %s138, 0
      %s141 = sadd.s32 %s140, 1
      %s142 = scalar_select %p139, %s140, %s141
      %p145 = pneg %p139
      %p146 = scmp.eq.s32.totalorder %s27, 1
      %p147 = por %p145, %p146
      %p148 = scmp.ne.s32.totalorder %s140, %s143
      %p149 = scmp.eq.s32.totalorder %s27, 0
      %p150 = por %p148, %p149
      %p151 = scmp.ne.s32.totalorder %s140, %s143
      %p152 = scmp.eq.s32.totalorder %s32, 1
      %p153 = por %p151, %p152
      %p154 = scmp.ne.s32.totalorder %s143, %s144
      %p155 = scmp.eq.s32.totalorder %s32, 0
      %p156 = por %p154, %p155
      %p157 = scmp.ne.s32.totalorder %s143, %s144
      %p158 = scmp.eq.s32.totalorder %s33, 1
      %p159 = por %p157, %p158
      %p161 = scmp.ne.s32.totalorder %s144, %s160
      %p162 = scmp.eq.s32.totalorder %s33, 0
      %p163 = por %p161, %p162
      %s164 = ssub.s32 %s35, %s42
      %p165 = scmp.eq.s32.totalorder %s164, 0
      %s167 = sadd.s32 %s166, 1
      %s168 = scalar_select %p165, %s166, %s167
      %p171 = pneg %p165
      %p172 = scmp.eq.s32.totalorder %s27, 1
      %p173 = por %p171, %p172
      %p174 = scmp.ne.s32.totalorder %s166, %s169
      %p175 = scmp.eq.s32.totalorder %s27, 0
      %p176 = por %p174, %p175
      %p177 = scmp.ne.s32.totalorder %s166, %s169
      %p178 = scmp.eq.s32.totalorder %s32, 1
      %p179 = por %p177, %p178
      %p180 = scmp.ne.s32.totalorder %s169, %s170
      %p181 = scmp.eq.s32.totalorder %s32, 0
      %p182 = por %p180, %p181
      %p183 = scmp.ne.s32.totalorder %s169, %s170
      %p184 = scmp.eq.s32.totalorder %s33, 1
      %p185 = por %p183, %p184
      %p187 = scmp.ne.s32.totalorder %s170, %s186
      %p188 = scmp.eq.s32.totalorder %s33, 0
      %p189 = por %p187, %p188
      %s190 = ssub.s32 %s34, %s46
      %s191 = ssub.s32 %s35, %s42
      %s192 = sor.u32 %s190, %s191
      %p193 = scmp.eq.s32.totalorder %s192, 0
      %s195 = sadd.s32 %s194, 1
      %s196 = scalar_select %p193, %s194, %s195
      %p199 = pneg %p193
      %p200 = scmp.eq.s32.totalorder %s27, 1
      %p201 = por %p199, %p200
      %p202 = scmp.ne.s32.totalorder %s194, %s197
      %p203 = scmp.eq.s32.totalorder %s27, 0
      %p204 = por %p202, %p203
      %p205 = scmp.ne.s32.totalorder %s194, %s197
      %p206 = scmp.eq.s32.totalorder %s32, 1
      %p207 = por %p205, %p206
      %p208 = scmp.ne.s32.totalorder %s197, %s198
      %p209 = scmp.eq.s32.totalorder %s32, 0
      %p210 = por %p208, %p209
      %p211 = scmp.ne.s32.totalorder %s197, %s198
      %p212 = scmp.eq.s32.totalorder %s33, 1
      %p213 = por %p211, %p212
      %p215 = scmp.ne.s32.totalorder %s198, %s214
      %p216 = scmp.eq.s32.totalorder %s33, 0
      %p217 = por %p215, %p216
      %s218 = ssub.s32 %s34, %s46
      %s219 = ssub.s32 %s35, %s42
      %s220 = sor.u32 %s218, %s219
      %p221 = scmp.eq.s32.totalorder %s220, 0
      %s223 = sadd.s32 %s222, 1
      %s224 = scalar_select %p221, %s222, %s223
      %p227 = pneg %p221
      %p228 = scmp.eq.s32.totalorder %s27, 1
      %p229 = por %p227, %p228
      %p230 = scmp.ne.s32.totalorder %s222, %s225
      %p231 = scmp.eq.s32.totalorder %s27, 0
      %p232 = por %p230, %p231
      %p233 = scmp.ne.s32.totalorder %s222, %s225
      %p234 = scmp.eq.s32.totalorder %s32, 1
      %p235 = por %p233, %p234
      %p236 = scmp.ne.s32.totalorder %s225, %s226
      %p237 = scmp.eq.s32.totalorder %s32, 0
      %p238 = por %p236, %p237
      %p239 = scmp.ne.s32.totalorder %s225, %s226
      %p240 = scmp.eq.s32.totalorder %s33, 1
      %p241 = por %p239, %p240
      %p243 = scmp.ne.s32.totalorder %s226, %s242
      %p244 = scmp.eq.s32.totalorder %s33, 0
      %p245 = por %p243, %p244
      %s246 = ssub.s32 %s34, %s46
      %s247 = ssub.s32 %s35, %s42
      %s248 = sor.u32 %s246, %s247
      %p249 = scmp.eq.s32.totalorder %s248, 0
      %s251 = sadd.s32 %s250, 1
      %s252 = scalar_select %p249, %s250, %s251
      %p255 = pneg %p249
      %p256 = scmp.eq.s32.totalorder %s27, 1
      %p257 = por %p255, %p256
      %p258 = scmp.ne.s32.totalorder %s250, %s253
      %p259 = scmp.eq.s32.totalorder %s27, 0
      %p260 = por %p258, %p259
      %p261 = scmp.ne.s32.totalorder %s250, %s253
      %p262 = scmp.eq.s32.totalorder %s32, 1
      %p263 = por %p261, %p262
      %p264 = scmp.ne.s32.totalorder %s253, %s254
      %p265 = scmp.eq.s32.totalorder %s32, 0
      %p266 = por %p264, %p265
      %p267 = scmp.ne.s32.totalorder %s253, %s254
      %p268 = scmp.eq.s32.totalorder %s33, 1
      %p269 = por %p267, %p268
      %p271 = scmp.ne.s32.totalorder %s254, %s270
      %p272 = scmp.eq.s32.totalorder %s33, 0
      %p273 = por %p271, %p272
      %p274 = scmp.le.s32.totalorder 1, %s27
      %p275 = scmp.lt.s32.totalorder %s27, 3
      %p276 = pnand %p274, %p275
      %p277 = pneg %p276
      // Predicated region
      $region9: #{tpu_custom_call.1} parent=5 // pred_check
        _
      $region10: #{tpu_custom_call.1} parent=5 // pred_check_branch
        %279 = sbr.rel (%p276) target = $region12
      $region11: #{tpu_custom_call.1} parent=5 // pred_region
        %s280 = ssub.s32 %s27, 1
        // Predicated region
        $region13: #{tpu_custom_call.1} parent=11 // pred_check
          %p281 = pneg %p88
        $region14: #{tpu_custom_call.1} parent=11 // pred_check_branch
          %283 = sbr.rel (%p281) target = $region16
        $region15: #{tpu_custom_call.1} parent=11 // pred_region
          %s285 = ssub.s32 16, 16
          %286 = vsyncadd [#allocation6], %s285
          %s288 = sshll.u32 [#allocation5], 4
          %s289 = int_to_ptr.vmem [resolvable:$true] %s288
          %291 = dma.hbm_to_vmem [thread:$0]  %s1, 16, %s289, [#allocation6]
        $region16: #{tpu_custom_call.1} parent=11 // pred_fallthru
          _
        // Predicated region
        $region17: #{tpu_custom_call.1} parent=11 // pred_check
          %p292 = pneg %p109
        $region18: #{tpu_custom_call.1} parent=11 // pred_check_branch
          %294 = sbr.rel (%p292) target = $region20
        $region19: #{tpu_custom_call.1} parent=11 // pred_region
          %s296 = ssub.s32 512, 512
          %297 = vsyncadd [#allocation6], %s296
          %s298 = sshll.u32 [#allocation7], 4
          %s299 = int_to_ptr.vmem [resolvable:$true] %s298
          %304 = dma.hbm_to_vmem [thread:$0]  %s2, 512, %s299, [#allocation6], 128, 128, 8
        $region20: #{tpu_custom_call.1} parent=11 // pred_fallthru
          _
        // Predicated region
        $region21: #{tpu_custom_call.1} parent=11 // pred_check
          %p305 = pneg %p130
        $region22: #{tpu_custom_call.1} parent=11 // pred_check_branch
          %307 = sbr.rel (%p305) target = $region24
        $region23: #{tpu_custom_call.1} parent=11 // pred_region
          %s309 = ssub.s32 32, 32
          %310 = vsyncadd [#allocation9], %s309
          %s312 = sshll.u32 [#allocation8], 4
          %s313 = int_to_ptr.vmem [resolvable:$true] %s312
          %315 = dma.hbm_to_vmem [thread:$0]  %s3, 32, %s313, [#allocation9]
        $region24: #{tpu_custom_call.1} parent=11 // pred_fallthru
          _
        // Predicated region
        $region25: #{tpu_custom_call.1} parent=11 // pred_check
          %p316 = pneg %p156
        $region26: #{tpu_custom_call.1} parent=11 // pred_check_branch
          %318 = sbr.rel (%p316) target = $region28
        $region27: #{tpu_custom_call.1} parent=11 // pred_region
          %s320 = ssub.s32 128, 128
          %321 = vsyncadd [#allocation9], %s320
          %s322 = smul.addr %s37, 128
          %s323 = scalar_lea.hbm %s4, %s322
          %s325 = sshll.u32 [#allocation10], 4
          %s326 = int_to_ptr.vmem [resolvable:$true] %s325
          %328 = dma.hbm_to_vmem [thread:$0]  %s323, 128, %s326, [#allocation9]
        $region28: #{tpu_custom_call.1} parent=11 // pred_fallthru
          _
        // Predicated region
        $region29: #{tpu_custom_call.1} parent=11 // pred_check
          %p329 = pneg %p182
        $region30: #{tpu_custom_call.1} parent=11 // pred_check_branch
          %331 = sbr.rel (%p329) target = $region32
        $region31: #{tpu_custom_call.1} parent=11 // pred_region
          %s333 = ssub.s32 128, 128
          %334 = vsyncadd [#allocation12], %s333
          %s335 = smul.addr %s37, 128
          %s336 = scalar_lea.hbm %s5, %s335
          %s338 = sshll.u32 [#allocation11], 4
          %s339 = int_to_ptr.vmem [resolvable:$true] %s338
          %341 = dma.hbm_to_vmem [thread:$0]  %s336, 128, %s339, [#allocation12]
        $region32: #{tpu_custom_call.1} parent=11 // pred_fallthru
          _
      $region12: #{tpu_custom_call.1} parent=5 // pred_fallthru
        _
      %p342 = scmp.lt.s32.totalorder %s27, 2
      // Predicated region
      $region33: #{tpu_custom_call.1} parent=5 // pred_check
        %p343 = pneg %p342
      $region34: #{tpu_custom_call.1} parent=5 // pred_check_branch
        %345 = sbr.rel (%p343) target = $region36
      $region35: #{tpu_custom_call.1} parent=5 // pred_region
        // Predicated region
        $region37: #{tpu_custom_call.1} parent=35 // pred_check
          %p346 = pneg %p61
        $region38: #{tpu_custom_call.1} parent=35 // pred_check_branch
          %348 = sbr.rel (%p346) target = $region40
        $region39: #{tpu_custom_call.1} parent=35 // pred_region
          %s349 = sand.u32 %s51, 1
          %s350 = scalar_lea.sflag [#allocation3], %s349
          %s351 = sand.u32 %s51, 1
          %s352 = smul.addr %s351, 8
          %s353 = scalar_lea.vmem [#allocation2], %s352
          %s355 = ssub.s32 128, 128
          %356 = vsyncadd %s350, %s355
          %s357 = sadd.s32 %s35, %s34
          %s358 = smul.addr %s357, 128
          %s359 = scalar_lea.hbm %s0, %s358
          %s361 = sshll.u32 %s353, 4
          %s362 = int_to_ptr.vmem [resolvable:$true] %s361
          %364 = dma.hbm_to_vmem [thread:$0]  %s359, 128, %s362, %s350
        $region40: #{tpu_custom_call.1} parent=35 // pred_fallthru
          _
      $region36: #{tpu_custom_call.1} parent=5 // pred_fallthru
        _
      %p365 = scmp.le.s32.totalorder 1, %s27
      %p366 = scmp.lt.s32.totalorder %s27, 3
      %p367 = pnand %p365, %p366
      %p368 = pneg %p367
      // Predicated region
      $region41: #{tpu_custom_call.1} parent=5 // pred_check
        _
      $region42: #{tpu_custom_call.1} parent=5 // pred_check_branch
        %370 = sbr.rel (%p367) target = $region44
      $region43: #{tpu_custom_call.1} parent=5 // pred_region
        %s371 = ssub.s32 %s27, 1
        %s372 = sand.u32 %s54, 1
        %s373 = scalar_lea.sflag [#allocation3], %s372
        %s374 = sand.u32 %s54, 1
        %s375 = smul.addr %s374, 8
        %s376 = scalar_lea.vmem [#allocation2], %s375
        // Predicated region
        $region45: #{tpu_custom_call.1} parent=43 // pred_check
          %p377 = pneg %p67
        $region46: #{tpu_custom_call.1} parent=43 // pred_check_branch
          %379 = sbr.rel (%p377) target = $region48
        $region47: #{tpu_custom_call.1} parent=43 // pred_region
          %380 = dma.done %s373, 128
        $region48: #{tpu_custom_call.1} parent=43 // pred_fallthru
          _
        // Predicated region
        $region49: #{tpu_custom_call.1} parent=43 // pred_check
          %p381 = pneg %p88
        $region50: #{tpu_custom_call.1} parent=43 // pred_check_branch
          %383 = sbr.rel (%p381) target = $region52
        $region51: #{tpu_custom_call.1} parent=43 // pred_region
          %384 = dma.done [#allocation6], 16
        $region52: #{tpu_custom_call.1} parent=43 // pred_fallthru
          _
        // Predicated region
        $region53: #{tpu_custom_call.1} parent=43 // pred_check
          %p385 = pneg %p109
        $region54: #{tpu_custom_call.1} parent=43 // pred_check_branch
          %387 = sbr.rel (%p385) target = $region56
        $region55: #{tpu_custom_call.1} parent=43 // pred_region
          %388 = dma.done [#allocation6], 512
        $region56: #{tpu_custom_call.1} parent=43 // pred_fallthru
          _
        // Predicated region
        $region57: #{tpu_custom_call.1} parent=43 // pred_check
          %p389 = pneg %p130
        $region58: #{tpu_custom_call.1} parent=43 // pred_check_branch
          %391 = sbr.rel (%p389) target = $region60
        $region59: #{tpu_custom_call.1} parent=43 // pred_region
          %392 = dma.done [#allocation9], 32
        $region60: #{tpu_custom_call.1} parent=43 // pred_fallthru
          _
        // Predicated region
        $region61: #{tpu_custom_call.1} parent=43 // pred_check
          %p393 = pneg %p156
        $region62: #{tpu_custom_call.1} parent=43 // pred_check_branch
          %395 = sbr.rel (%p393) target = $region64
        $region63: #{tpu_custom_call.1} parent=43 // pred_region
          %396 = dma.done [#allocation9], 128
        $region64: #{tpu_custom_call.1} parent=43 // pred_fallthru
          _
        // Predicated region
        $region65: #{tpu_custom_call.1} parent=43 // pred_check
          %p397 = pneg %p182
        $region66: #{tpu_custom_call.1} parent=43 // pred_check_branch
          %399 = sbr.rel (%p397) target = $region68
        $region67: #{tpu_custom_call.1} parent=43 // pred_region
          %400 = dma.done [#allocation12], 128
        $region68: #{tpu_custom_call.1} parent=43 // pred_fallthru
          _
        %s401 = sand.u32 %s54, 1
        %s402 = scalar_lea.sflag [#allocation3], %s401
        %s403 = sand.u32 %s54, 1
        %s404 = smul.addr %s403, 8
        %s405 = scalar_lea.vmem [#allocation2], %s404
        %p406 = pneg %p67
        %p407 = pneg %p64
        %p408 = pneg %p88
        %p409 = pneg %p85
        %p410 = pneg %p109
        %p411 = pneg %p106
        %p412 = pneg %p130
        %p413 = pneg %p127
        %p414 = pneg %p156
        %p415 = pneg %p153
        %p416 = pneg %p182
        %p417 = pneg %p179
        %p418 = pneg %p210
        %p419 = pneg %p207
        %s420 = sand.u32 %s197, 1
        %s421 = scalar_lea.sflag [#allocation4], %s420
        %s422 = sand.u32 %s197, 1
        %s423 = smul.addr %s422, 4
        %s424 = scalar_lea.vmem [#allocation13], %s423
        %p425 = pneg %p238
        %p426 = pneg %p235
        %s427 = sand.u32 %s32, 1
        %s428 = scalar_lea.sflag [#allocation15], %s427
        %s429 = sand.u32 %s225, 1
        %s430 = smul.addr %s429, 4
        %s431 = scalar_lea.vmem [#allocation14], %s430
        %p432 = pneg %p266
        %p433 = pneg %p263
        %s434 = sand.u32 %s32, 1
        %s435 = scalar_lea.sflag [#allocation15], %s434
        %s436 = sand.u32 %s253, 1
        %s437 = smul.addr %s436, 4
        %s438 = scalar_lea.vmem [#allocation16], %s437
        %v440 = vld [vmem:[%s376] sm:$0xff]
        %v441 = vmul.f32 %v440, %v440
        %vm442 = vcmask 261120
        %v443 = vsel %vm442, %v441, 0.0
        %444 = vadd.xlane.f32.xlu0 %v443
        %v445 = vpop.xlane.xlu0 %444
        %v446 = vrcp.pop 32.0
        %v447 = vmul.f32 %v445, %v446
        %v448 = vadd.f32 %v447, 1e-06
        %v449 = vrsqrt.pop %v448
        %v450 = vmul.f32 %v440, %v449
        %v451 = vld [vmem:[#allocation5] sm:$0x1]
        %v453 = vlaneseq
        %v454 = vshrl.u32 %v453, 7
        %v455 = vsub.s32 0, %v454
        %v456 = vrot.slane %v451, %v455
        %v458 = vmul.f32 %v450, %v456
        %v459 = vpack.c.bf16 %v458, %v458
        %v460 = vld [vmem:[#allocation7] sm:$0xff]
        %v461 = vld [vmem:[#allocation7 + $0x8] sm:$0xff]
        %v462 = vld [vmem:[#allocation7 + $0x10] sm:$0xff]
        %v463 = vld [vmem:[#allocation7 + $0x18] sm:$0xff]
        %v464 = vld [vmem:[#allocation8] sm:$0x3]
        %v466 = vlaneseq
        %v467 = vshrl.u32 %v466, 7
        %v468 = vsub.s32 0, %v467
        %v469 = vrot.slane %v464, %v468
        %v470 = vlaneseq
        %v471 = vshrl.u32 %v470, 7
        %v472 = vsub.s32 1, %v471
        %v473 = vrot.slane %v464, %v472
        %v480 = vunpack.c.l.b16 %v460
        %v481 = vunpack.c.h.b16 %v460
        %v482 = vunpack.c.l.b16 %v461
        %v483 = vunpack.c.h.b16 %v461
        %v484 = vunpack.c.l.b16 %v462
        %v485 = vunpack.c.h.b16 %v462
        %v486 = vunpack.c.l.b16 %v463
        %v487 = vunpack.c.h.b16 %v463
        %v488 = vpack.c.b16 %v482, %v480
        %v489 = vpack.c.b16 %v483, %v481
        %v490 = vpack.c.b16 %v486, %v484
        %v491 = vpack.c.b16 %v487, %v485
        %v497 = vsel %vm442, %v459, 0
        %499 = vmatprep.subr.bf16.mxu0 %v489
        %500 = vmatpush1.bf16.msra.mxu0 %v488
        %501 = vmatprep.subr.bf16.mxu0 %v491
        %502 = vmatpush1.bf16.msra.mxu0 %v490
        %503 = vmatprep.subr.bf16.mxu0 0
        %504 = vmatpush1.bf16.msra.mxu0 0
        %505 = vmatprep.subr.bf16.mxu0 0
        %506 = vmatpush1.bf16.msra.mxu0 0
        %507 = vmatprep.subr.bf16.mxu0 0
        %508 = vmatpush1.bf16.msra.mxu0 0
        %509 = vmatprep.subr.bf16.mxu0 0
        %510 = vmatpush1.bf16.msra.mxu0 0
        %511 = vmatprep.subr.bf16.mxu0 0
        %512 = vmatpush1.bf16.msra.mxu0 0
        %513 = vmatprep.subr.bf16.mxu0 0
        %514 = vmatpush1.bf16.msra.mxu0 0
        %515 = vmatprep.subr.bf16.mxu0 0
        %516 = vmatpush1.bf16.msra.mxu0 0
        %517 = vmatprep.subr.bf16.mxu0 0
        %518 = vmatpush1.bf16.msra.mxu0 0
        %519 = vmatprep.subr.bf16.mxu0 0
        %520 = vmatpush1.bf16.msra.mxu0 0
        %521 = vmatprep.subr.bf16.mxu0 0
        %522 = vmatpush1.bf16.msra.mxu0 0
        %523 = vmatprep.subr.bf16.mxu0 0
        %524 = vmatpush1.bf16.msra.mxu0 0
        %525 = vmatprep.subr.bf16.mxu0 0
        %526 = vmatpush1.bf16.msra.mxu0 0
        %527 = vmatprep.subr.bf16.mxu0 0
        %528 = vmatpush1.bf16.msra.mxu0 0
        %529 = vmatprep.subr.bf16.mxu0 0
        %530 = vmatpush1.bf16.msra.mxu0 0
        %531 = vmatprep.mubr.bf16.mxu0 0
        %532 = vmatmul.mubr.bf16.gmra.mrb[0].mxu0 %v497
        %v533 = vpop.f32.mrb[0].mxu0
        %v534 = vadd.f32 %v469, %v533
        %v535 = vpop.f32.mrb[0].mxu0
        %v536 = vadd.f32 %v473, %v535
        %v537 = vpop.f32.mrb[0].mxu0
        %v538 = vpop.f32.mrb[0].mxu0
        %539 = vdwg.mxu0
        %v540 = vld [vmem:[#allocation10] sm:$0xff]
        %v541 = vld [vmem:[#allocation11] sm:$0xff]
        %v542 = vmul.f32 %v534, %v540
        %544 = vrot.lane.b32.xlu0 %v541, 32
        %v545 = vpop.permute.xlu0 %544
        %v547 = vmul.f32 %v534, %v545
        %549 = vrot.lane.b32.xlu0 %v547, 96
        %v550 = vpop.permute.xlu0 %549
        %v552 = vadd.f32 %v542, %v550
        %v553 = vpack.c.bf16 %v552, %v552
        %vm554 = vcmask 257024
        %555 = vst.msk [vmem:[%s424] sm:$0xf] %vm554, %v553
        %557 = vrot.lane.b32.xlu0 %v540, 64
        %v558 = vpop.permute.xlu0 %557
        %v560 = vmul.f32 %v534, %v558
        %561 = vrot.lane.b32.xlu0 %v541, 96
        %v562 = vpop.permute.xlu0 %561
        %v564 = vmul.f32 %v534, %v562
        %566 = vrot.lane.b32.xlu0 %v564, 96
        %v567 = vpop.permute.xlu0 %566
        %v569 = vadd.f32 %v560, %v567
        %v570 = vpack.c.bf16 %v569, %v569
        %v572 = vunpack.c.l.b16 %v570
        %v573 = vpack.c.b16 %v572, %v572
        %574 = vrot.lane.b32.xlu0 %v573, 64
        %v575 = vpop.permute.xlu0 %574
        %577 = vst.msk [vmem:[%s431] sm:$0xf] %vm554, %v575
        %v578 = vpack.c.bf16 %v536, %v536
        %579 = vst.msk [vmem:[%s438] sm:$0xf] %vm554, %v578
        %s580 = sand.u32 %s197, 1
        %s581 = scalar_lea.sflag [#allocation4], %s580
        %s582 = sand.u32 %s197, 1
        %s583 = smul.addr %s582, 4
        %s584 = scalar_lea.vmem [#allocation13], %s583
        %s585 = sand.u32 %s32, 1
        %s586 = scalar_lea.sflag [#allocation15], %s585
        %s587 = sand.u32 %s225, 1
        %s588 = smul.addr %s587, 4
        %s589 = scalar_lea.vmem [#allocation14], %s588
        %s590 = sand.u32 %s32, 1
        %s591 = scalar_lea.sflag [#allocation15], %s590
        %s592 = sand.u32 %s253, 1
        %s593 = smul.addr %s592, 4
        %s594 = scalar_lea.vmem [#allocation16], %s593
        // Predicated region
        $region69: #{tpu_custom_call.1} parent=43 // pred_check
          %p595 = pneg %p207
        $region70: #{tpu_custom_call.1} parent=43 // pred_check_branch
          %597 = sbr.rel (%p595) target = $region72
        $region71: #{tpu_custom_call.1} parent=43 // pred_region
          %s599 = ssub.s32 64, 64
          %600 = vsyncadd %s581, %s599
          %s601 = sadd.s32 %s37, %s36
          %s602 = smul.addr %s601, 64
          %s603 = scalar_lea.hbm %s6, %s602
          %s605 = sshll.u32 %s584, 4
          %s606 = int_to_ptr.vmem [resolvable:$true] %s605
          %608 = dma.vmem_to_hbm [thread:$0]  %s606, 64, %s603, %s581
        $region72: #{tpu_custom_call.1} parent=43 // pred_fallthru
          _
        // Predicated region
        $region73: #{tpu_custom_call.1} parent=43 // pred_check
          %p609 = pneg %p235
        $region74: #{tpu_custom_call.1} parent=43 // pred_check_branch
          %611 = sbr.rel (%p609) target = $region76
        $region75: #{tpu_custom_call.1} parent=43 // pred_region
          %s613 = ssub.s32 64, 64
          %614 = vsyncadd %s586, %s613
          %s615 = sadd.s32 %s37, %s36
          %s616 = smul.addr %s615, 64
          %s617 = scalar_lea.hbm %s7, %s616
          %s619 = sshll.u32 %s589, 4
          %s620 = int_to_ptr.vmem [resolvable:$true] %s619
          %622 = dma.vmem_to_hbm [thread:$0]  %s620, 64, %s617, %s586
        $region76: #{tpu_custom_call.1} parent=43 // pred_fallthru
          _
        // Predicated region
        $region77: #{tpu_custom_call.1} parent=43 // pred_check
          %p623 = pneg %p263
        $region78: #{tpu_custom_call.1} parent=43 // pred_check_branch
          %625 = sbr.rel (%p623) target = $region80
        $region79: #{tpu_custom_call.1} parent=43 // pred_region
          %s627 = ssub.s32 64, 64
          %628 = vsyncadd %s591, %s627
          %s629 = sadd.s32 %s37, %s36
          %s630 = smul.addr %s629, 64
          %s631 = scalar_lea.hbm %s8, %s630
          %s633 = sshll.u32 %s594, 4
          %s634 = int_to_ptr.vmem [resolvable:$true] %s633
          %636 = dma.vmem_to_hbm [thread:$0]  %s634, 64, %s631, %s591
        $region80: #{tpu_custom_call.1} parent=43 // pred_fallthru
          _
      $region44: #{tpu_custom_call.1} parent=5 // pred_fallthru
        _
      %p637 = scmp.le.s32.totalorder 2, %s27
      // Predicated region
      $region81: #{tpu_custom_call.1} parent=5 // pred_check
        %p638 = pneg %p637
      $region82: #{tpu_custom_call.1} parent=5 // pred_check_branch
        %640 = sbr.rel (%p638) target = $region84
      $region83: #{tpu_custom_call.1} parent=5 // pred_region
        %s641 = ssub.s32 %s27, 2
        // Predicated region
        $region85: #{tpu_custom_call.1} parent=83 // pred_check
          %p642 = pneg %p213
        $region86: #{tpu_custom_call.1} parent=83 // pred_check_branch
          %644 = sbr.rel (%p642) target = $region88
        $region87: #{tpu_custom_call.1} parent=83 // pred_region
          %s645 = sand.u32 %s198, 1
          %s646 = scalar_lea.sflag [#allocation4], %s645
          %s647 = sand.u32 %s198, 1
          %s648 = smul.addr %s647, 4
          %s649 = scalar_lea.vmem [#allocation13], %s648
          %650 = dma.done %s646, 64
        $region88: #{tpu_custom_call.1} parent=83 // pred_fallthru
          _
        // Predicated region
        $region89: #{tpu_custom_call.1} parent=83 // pred_check
          %p651 = pneg %p241
        $region90: #{tpu_custom_call.1} parent=83 // pred_check_branch
          %653 = sbr.rel (%p651) target = $region92
        $region91: #{tpu_custom_call.1} parent=83 // pred_region
          %s654 = sand.u32 %s33, 1
          %s655 = scalar_lea.sflag [#allocation15], %s654
          %s656 = sand.u32 %s226, 1
          %s657 = smul.addr %s656, 4
          %s658 = scalar_lea.vmem [#allocation14], %s657
          %659 = dma.done %s655, 64
        $region92: #{tpu_custom_call.1} parent=83 // pred_fallthru
          _
        // Predicated region
        $region93: #{tpu_custom_call.1} parent=83 // pred_check
          %p660 = pneg %p269
        $region94: #{tpu_custom_call.1} parent=83 // pred_check_branch
          %662 = sbr.rel (%p660) target = $region96
        $region95: #{tpu_custom_call.1} parent=83 // pred_region
          %s663 = sand.u32 %s33, 1
          %s664 = scalar_lea.sflag [#allocation15], %s663
          %s665 = sand.u32 %s254, 1
          %s666 = smul.addr %s665, 4
          %s667 = scalar_lea.vmem [#allocation16], %s666
          %668 = dma.done %s664, 64
        $region96: #{tpu_custom_call.1} parent=83 // pred_fallthru
          _
      $region84: #{tpu_custom_call.1} parent=5 // pred_fallthru
        _
    $region6: #{tpu_custom_call.1} parent=1 // loop_footer
      %s31 = sadd.s32 1, %s27
    $region7: #{tpu_custom_call.1} parent=1 // loop_footer_branch
      %26 = sbr.rel target = $region3
    $region8: #{tpu_custom_call.1} parent=1 // loop_exit
      _
    %669 = vsyncpa [#allocation3], 1
    %s670 = scalar_lea.sflag [#allocation3], 1
    %671 = vsyncpa %s670, 1
    %672 = vsyncpa [#allocation6], 1
    %673 = vsyncpa [#allocation9], 1
    %674 = vsyncpa [#allocation12], 1
    %675 = vsyncpa [#allocation4], 1
    %s676 = scalar_lea.sflag [#allocation4], 1
    %677 = vsyncpa %s676, 1
    %678 = vsyncpa [#allocation15], 1
    %s679 = scalar_lea.sflag [#allocation15], 1
    %680 = vsyncpa %s679, 1

</llo_original>
